<compile_context>
chip_gen: v7x
topology: tpu7x:2x2x1
jax: 0.10.0
libtpu: 0.0.40
codegen_flags: <defaults>
</compile_context>

<pallas_src>
import functools

import jax
import jax.numpy as jnp
from jax import lax
from jax.experimental import pallas as pl
from jax.experimental.pallas import tpu as pltpu


def _kd_loss_kernel(s_ref, t_ref, out_ref, kl_acc, mse_acc, *,
                    temperature, hw, hw_tile, need_kl, need_mse, needs_mask):
    """Grid = (batch, hw_tiles).  Input blocks are (1, C, hw_tile): C on
    sublanes, spatial on lanes.  Accumulate per-column partials over the hw
    axis; reduce once per batch at the last spatial step."""
    j = pl.program_id(1)

    @pl.when(j == 0)
    def _():
        kl_acc[...] = jnp.zeros_like(kl_acc)
        mse_acc[...] = jnp.zeros_like(mse_acc)

    s = s_ref[0].astype(jnp.float32)   # (C, hw_tile)
    t = t_ref[0].astype(jnp.float32)

    if needs_mask:
        # Lane mask for the (static) ragged last tile: garbage columns read
        # from the partial block never reach the accumulators.
        col = j * hw_tile + lax.broadcasted_iota(jnp.int32, (1, hw_tile), 1)
        mask = col < hw

    if need_kl:
        inv_t = jnp.float32(1.0 / temperature)
        ss = s * inv_t
        ts = t * inv_t
        s_sh = ss - jnp.max(ss, axis=0, keepdims=True)
        t_sh = ts - jnp.max(ts, axis=0, keepdims=True)
        s_sumexp = jnp.sum(jnp.exp(s_sh), axis=0, keepdims=True)
        t_exp = jnp.exp(t_sh)
        t_sum = jnp.sum(t_exp, axis=0, keepdims=True)
        cross = jnp.sum(t_exp * (t_sh - s_sh), axis=0, keepdims=True)
        # KL per spatial column:
        #   sum_C p_t * (log p_t - log p_s)
        #   = cross / t_sum + log(s_sumexp) - log(t_sum)
        inv_tsum = jnp.float32(1.0) / t_sum
        kl_col = cross * inv_tsum + jnp.log(s_sumexp * inv_tsum)
        if needs_mask:
            kl_col = jnp.where(mask, kl_col, jnp.float32(0.0))
        kl_acc[...] += kl_col

    if need_mse:
        diff = s - t
        mse_col = jnp.sum(diff * diff, axis=0, keepdims=True)
        if needs_mask:
            mse_col = jnp.where(mask, mse_col, jnp.float32(0.0))
        mse_acc[...] += mse_col

    @pl.when(j == pl.num_programs(1) - 1)
    def _():
        kl_tot = jnp.sum(kl_acc[...]) if need_kl else jnp.float32(0.0)
        mse_tot = jnp.sum(mse_acc[...]) if need_mse else jnp.float32(0.0)
        # One full lane-dense (8,128) unmasked store per batch:
        # row 0 = kl partial, row 1 = mse partial.
        sub = lax.broadcasted_iota(jnp.int32, (8, 128), 0)
        out_ref[0] = jnp.where(sub == 0, kl_tot,
                               jnp.where(sub == 1, mse_tot, jnp.float32(0.0)))


def undeviating_distillation_loss(student_logits, teacher_logits,
                                  alpha=1.0, temperature=5.0, hw_tile=None):
    assert student_logits.shape == teacher_logits.shape
    shape = student_logits.shape
    assert len(shape) >= 2, "expect (N, C, ...) logits"
    n, c = shape[0], shape[1]
    hw = 1
    for d in shape[2:]:
        hw *= d
    numel = n * c * hw

    # Free reshape (no data movement): (N, C, H, W, ...) -> (N, C, HW).
    s3 = student_logits.reshape(n, c, hw)
    t3 = teacher_logits.reshape(n, c, hw)
    # TODO(synk): for pure 2-D (N, C) logits this lane-sparse layout (HW == 1)
    # is correct but slow; the module targets pixel-wise (NCHW) distillation.

    LANE = 128
    if hw_tile is None:
        # ~1 MiB logical per input block; 2 inputs x 2 pipeline buffers stays
        # well under the scoped-VMEM defaults on v5e / v6e / v7x.
        target_bytes = 1 << 20
        itemsize = jnp.dtype(student_logits.dtype).itemsize
        bytes_per_col = max(1, c * itemsize)
        max_tile = max(LANE, (target_bytes // bytes_per_col) // LANE * LANE)
        if hw <= max_tile:
            hw_tile = hw                      # single full-extent spatial block
        else:
            num_tiles = pl.cdiv(hw, max_tile)
            # Re-balance to minimize the ragged tail (multiple of 128 lanes).
            hw_tile = pl.cdiv(pl.cdiv(hw, num_tiles), LANE) * LANE
    else:
        if hw_tile >= hw:
            hw_tile = hw
        else:
            assert hw_tile % LANE == 0, "hw_tile must be a multiple of 128"
    num_tiles = pl.cdiv(hw, hw_tile)
    needs_mask = (num_tiles * hw_tile) != hw

    need_kl = float(alpha) != 0.0
    need_mse = float(alpha) != 1.0

    kernel = functools.partial(
        _kd_loss_kernel, temperature=float(temperature), hw=hw,
        hw_tile=hw_tile, need_kl=need_kl, need_mse=need_mse,
        needs_mask=needs_mask)

    partials = pl.pallas_call(
        kernel,
        out_shape=jax.ShapeDtypeStruct((n, 8, 128), jnp.float32),
        grid_spec=pltpu.PrefetchScalarGridSpec(
            num_scalar_prefetch=0,
            grid=(n, num_tiles),
            in_specs=[
                pl.BlockSpec((1, c, hw_tile), lambda b, j: (b, 0, j)),
                pl.BlockSpec((1, c, hw_tile), lambda b, j: (b, 0, j)),
            ],
            out_specs=pl.BlockSpec((1, 8, 128), lambda b, j: (b, 0, 0)),
            scratch_shapes=[
                pltpu.VMEM((1, hw_tile), jnp.float32),   # kl per-column acc
                pltpu.VMEM((1, hw_tile), jnp.float32),   # mse per-column acc
            ],
        ),
        compiler_params=pltpu.CompilerParams(
            dimension_semantics=("parallel", "arbitrary")),
    )(s3, t3)

    kl_sum = jnp.sum(partials[:, 0, 0])
    mse_sum = jnp.sum(partials[:, 1, 0])

    # batchmean: divide by the ORIGINAL first-dim batch size (PyTorch semantics)
    loss_distillation = (kl_sum / jnp.float32(n)) * jnp.float32(temperature) ** 2
    loss_mse = mse_sum / jnp.float32(numel)
    return (jnp.float32(alpha) * loss_distillation
            + jnp.float32(1.0 - alpha) * loss_mse)


def _reference_loss(student, teacher, alpha=1.0, temperature=5.0):
    """Pure-JAX reference mirroring the PyTorch module."""
    soft_teacher = jax.nn.softmax(teacher / temperature, axis=1)
    log_soft_student = jax.nn.log_softmax(student / temperature, axis=1)
    log_soft_teacher = jax.nn.log_softmax(teacher / temperature, axis=1)
    kl = jnp.sum(soft_teacher * (log_soft_teacher - log_soft_student)) / student.shape[0]
    loss_distill = kl * temperature ** 2
    loss_mse = jnp.mean((student - teacher) ** 2)
    return alpha * loss_distill + (1.0 - alpha) * loss_mse


if __name__ == "__main__":
    key = jax.random.PRNGKey(0)
    k1, k2 = jax.random.split(key)

    # Small NCHW logits (segmentation-style distillation): batch=2, classes=4, 16x16
    student = jax.random.normal(k1, (2, 4, 16, 16), dtype=jnp.float32)
    teacher = jax.random.normal(k2, (2, 4, 16, 16), dtype=jnp.float32)

    # alpha < 1 exercises both the KL and the MSE paths.
    loss = undeviating_distillation_loss(student, teacher, alpha=0.7, temperature=5.0)
    loss = jax.block_until_ready(loss)
    ref = _reference_loss(student, teacher, alpha=0.7, temperature=5.0)
    assert jnp.allclose(loss, ref, rtol=1e-5, atol=1e-5), (loss, ref)

    # Force multiple lane tiles to exercise the accumulate-across-grid path.
    loss_mt = undeviating_distillation_loss(student, teacher, alpha=0.7,
                                            temperature=5.0, hw_tile=128)
    loss_mt = jax.block_until_ready(loss_mt)
    assert jnp.allclose(loss_mt, ref, rtol=1e-5, atol=1e-5), (loss_mt, ref)

    # alpha == 1.0 (pure KL, MSE branch compiled out) / alpha == 0.0 (pure MSE).
    for a in (1.0, 0.0):
        la = undeviating_distillation_loss(student, teacher, alpha=a, temperature=5.0)
        la = jax.block_until_ready(la)
        ra = _reference_loss(student, teacher, alpha=a, temperature=5.0)
        assert jnp.allclose(la, ra, rtol=1e-5, atol=1e-5), (a, la, ra)

    # Odd channel count + spatial size < 128 (single full-extent spatial block).
    s2 = jax.random.normal(jax.random.PRNGKey(1), (3, 5, 9, 11), dtype=jnp.float32)
    t2 = jax.random.normal(jax.random.PRNGKey(2), (3, 5, 9, 11), dtype=jnp.float32)
    loss2 = undeviating_distillation_loss(s2, t2, alpha=0.4, temperature=3.0)
    loss2 = jax.block_until_ready(loss2)
    ref2 = _reference_loss(s2, t2, alpha=0.4, temperature=3.0)
    assert jnp.allclose(loss2, ref2, rtol=1e-5, atol=1e-5), (loss2, ref2)

    # Ragged spatial size with multiple tiles -> in-kernel masked tail (no pad).
    s3_ = jax.random.normal(jax.random.PRNGKey(3), (2, 4, 10, 20), dtype=jnp.float32)
    t3_ = jax.random.normal(jax.random.PRNGKey(4), (2, 4, 10, 20), dtype=jnp.float32)
    loss3 = undeviating_distillation_loss(s3_, t3_, alpha=0.3, temperature=2.0,
                                          hw_tile=128)
    loss3 = jax.block_until_ready(loss3)
    ref3 = _reference_loss(s3_, t3_, alpha=0.3, temperature=2.0)
    assert jnp.allclose(loss3, ref3, rtol=1e-5, atol=1e-5), (loss3, ref3)

    print("KERNEL_OK")
</pallas_src>

<mosaic_0001>
module attributes {stable_mosaic.version = 11 : i64} {
  func.func @_kd_loss_kernel(%arg0: i32, %arg1: i32, %arg2: memref<1x4x256xf32, #tpu.memory_space<vmem>>, %arg3: memref<1x4x256xf32, #tpu.memory_space<vmem>>, %arg4: memref<1x8x128xf32, #tpu.memory_space<vmem>>, %arg5: memref<1x256xf32, #tpu.memory_space<vmem>>, %arg6: memref<1x256xf32, #tpu.memory_space<vmem>>) attributes {dimension_semantics = [#tpu.dimension_semantics<parallel>, #tpu.dimension_semantics<arbitrary>], iteration_bounds = array<i64: 2, 1>, scalar_prefetch = 0 : i64, scratch_operands = 2 : i64, tpu.core_type = #tpu.core_type<tc>, window_params = [{transform_indices = @transform_0, window_bounds = array<i64: 1, 4, 256>}, {transform_indices = @transform_1, window_bounds = array<i64: 1, 4, 256>}, {transform_indices = @transform_2, window_bounds = array<i64: 1, 8, 128>}]} {
    %c0_i32 = arith.constant 0 : i32
    %0 = arith.cmpi eq, %arg1, %c0_i32 : i32
    %1 = arith.extui %0 : i1 to i32
    %c0_i32_0 = arith.constant 0 : i32
    %2 = arith.cmpi ne, %1, %c0_i32_0 : i32
    scf.if %2 {
      %cst_24 = arith.constant 0.000000e+00 : f32
      %48 = vector.broadcast %cst_24 : f32 to vector<1x256xf32>
      %c0_25 = arith.constant 0 : index
      %c0_26 = arith.constant 0 : index
      %49 = vector.load %arg5[%c0_25, %c0_26] : memref<1x256xf32, #tpu.memory_space<vmem>>, vector<1x256xf32>
      tpu.vector_store %arg5[%c0_25, %c0_26], %48 {strides = array<i32>} : memref<1x256xf32, #tpu.memory_space<vmem>>, vector<1x256xf32>,
      %cst_27 = arith.constant 0.000000e+00 : f32
      %50 = vector.broadcast %cst_27 : f32 to vector<1x256xf32>
      %c0_28 = arith.constant 0 : index
      %c0_29 = arith.constant 0 : index
      %51 = vector.load %arg6[%c0_28, %c0_29] : memref<1x256xf32, #tpu.memory_space<vmem>>, vector<1x256xf32>
      tpu.vector_store %arg6[%c0_28, %c0_29], %50 {strides = array<i32>} : memref<1x256xf32, #tpu.memory_space<vmem>>, vector<1x256xf32>,
    } else {
    }
    %c0 = arith.constant 0 : index
    %c0_1 = arith.constant 0 : index
    %c0_2 = arith.constant 0 : index
    %3 = vector.load %arg2[%c0, %c0_1, %c0_2] : memref<1x4x256xf32, #tpu.memory_space<vmem>>, vector<1x4x256xf32>
    %4 = vector.shape_cast %3 : vector<1x4x256xf32> to vector<4x256xf32>
    %c0_3 = arith.constant 0 : index
    %c0_4 = arith.constant 0 : index
    %c0_5 = arith.constant 0 : index
    %5 = vector.load %arg3[%c0_3, %c0_4, %c0_5] : memref<1x4x256xf32, #tpu.memory_space<vmem>>, vector<1x4x256xf32>
    %6 = vector.shape_cast %5 : vector<1x4x256xf32> to vector<4x256xf32>
    %cst = arith.constant 2.000000e-01 : f32
    %7 = vector.broadcast %cst : f32 to vector<4x256xf32>
    %8 = arith.mulf %4, %7 : vector<4x256xf32>
    %cst_6 = arith.constant 2.000000e-01 : f32
    %9 = vector.broadcast %cst_6 : f32 to vector<4x256xf32>
    %10 = arith.mulf %6, %9 : vector<4x256xf32>
    %cst_7 = arith.constant dense<0xFF800000> : vector<256xf32>
    %11 = vector.multi_reduction <maximumf>, %8, %cst_7 [0] : vector<4x256xf32> to vector<256xf32>
    %12 = vector.shape_cast %11 : vector<256xf32> to vector<1x256xf32>
    %13 = vector.broadcast %12 : vector<1x256xf32> to vector<4x256xf32>
    %14 = arith.subf %8, %13 : vector<4x256xf32>
    %cst_8 = arith.constant dense<0xFF800000> : vector<256xf32>
    %15 = vector.multi_reduction <maximumf>, %10, %cst_8 [0] : vector<4x256xf32> to vector<256xf32>
    %16 = vector.shape_cast %15 : vector<256xf32> to vector<1x256xf32>
    %17 = vector.broadcast %16 : vector<1x256xf32> to vector<4x256xf32>
    %18 = arith.subf %10, %17 : vector<4x256xf32>
    %19 = math.exp %14 : vector<4x256xf32>
    %cst_9 = arith.constant dense<0.000000e+00> : vector<256xf32>
    %20 = vector.multi_reduction <add>, %19, %cst_9 [0] : vector<4x256xf32> to vector<256xf32>
    %21 = vector.shape_cast %20 : vector<256xf32> to vector<1x256xf32>
    %22 = math.exp %18 : vector<4x256xf32>
    %cst_10 = arith.constant dense<0.000000e+00> : vector<256xf32>
    %23 = vector.multi_reduction <add>, %22, %cst_10 [0] : vector<4x256xf32> to vector<256xf32>
    %24 = vector.shape_cast %23 : vector<256xf32> to vector<1x256xf32>
    %25 = arith.subf %18, %14 : vector<4x256xf32>
    %26 = arith.mulf %22, %25 : vector<4x256xf32>
    %cst_11 = arith.constant dense<0.000000e+00> : vector<256xf32>
    %27 = vector.multi_reduction <add>, %26, %cst_11 [0] : vector<4x256xf32> to vector<256xf32>
    %28 = vector.shape_cast %27 : vector<256xf32> to vector<1x256xf32>
    %cst_12 = arith.constant 1.000000e+00 : f32
    %29 = vector.broadcast %cst_12 : f32 to vector<1x256xf32>
    %30 = arith.divf %29, %24 : vector<1x256xf32>
    %31 = arith.mulf %28, %30 : vector<1x256xf32>
    %32 = arith.mulf %21, %30 : vector<1x256xf32>
    %33 = math.log %32 : vector<1x256xf32>
    %34 = arith.addf %31, %33 : vector<1x256xf32>
    %c0_13 = arith.constant 0 : index
    %c0_14 = arith.constant 0 : index
    %35 = vector.load %arg5[%c0_13, %c0_14] : memref<1x256xf32, #tpu.memory_space<vmem>>, vector<1x256xf32>
    %36 = arith.addf %35, %34 : vector<1x256xf32>
    %c0_15 = arith.constant 0 : index
    %c0_16 = arith.constant 0 : index
    %37 = vector.load %arg5[%c0_15, %c0_16] : memref<1x256xf32, #tpu.memory_space<vmem>>, vector<1x256xf32>
    tpu.vector_store %arg5[%c0_15, %c0_16], %36 {strides = array<i32>} : memref<1x256xf32, #tpu.memory_space<vmem>>, vector<1x256xf32>,
    %38 = arith.subf %4, %6 : vector<4x256xf32>
    %39 = arith.mulf %38, %38 : vector<4x256xf32>
    %cst_17 = arith.constant dense<0.000000e+00> : vector<256xf32>
    %40 = vector.multi_reduction <add>, %39, %cst_17 [0] : vector<4x256xf32> to vector<256xf32>
    %41 = vector.shape_cast %40 : vector<256xf32> to vector<1x256xf32>
    %c0_18 = arith.constant 0 : index
    %c0_19 = arith.constant 0 : index
    %42 = vector.load %arg6[%c0_18, %c0_19] : memref<1x256xf32, #tpu.memory_space<vmem>>, vector<1x256xf32>
    %43 = arith.addf %42, %41 : vector<1x256xf32>
    %c0_20 = arith.constant 0 : index
    %c0_21 = arith.constant 0 : index
    %44 = vector.load %arg6[%c0_20, %c0_21] : memref<1x256xf32, #tpu.memory_space<vmem>>, vector<1x256xf32>
    tpu.vector_store %arg6[%c0_20, %c0_21], %43 {strides = array<i32>} : memref<1x256xf32, #tpu.memory_space<vmem>>, vector<1x256xf32>,
    %c0_i32_22 = arith.constant 0 : i32
    %45 = arith.cmpi eq, %arg1, %c0_i32_22 : i32
    %46 = arith.extui %45 : i1 to i32
    %c0_i32_23 = arith.constant 0 : i32
    %47 = arith.cmpi ne, %46, %c0_i32_23 : i32
    scf.if %47 {
      %c0_24 = arith.constant 0 : index
      %c0_25 = arith.constant 0 : index
      %48 = vector.load %arg5[%c0_24, %c0_25] : memref<1x256xf32, #tpu.memory_space<vmem>>, vector<1x256xf32>
      %49 = vector.shape_cast %48 : vector<1x256xf32> to vector<1x1x256xf32>
      %cst_26 = arith.constant dense<0.000000e+00> : vector<1xf32>
      %50 = vector.multi_reduction <add>, %49, %cst_26 [1, 2] : vector<1x1x256xf32> to vector<1xf32>
      %51 = vector.shape_cast %50 : vector<1xf32> to vector<1x1x1xf32>
      %52 = vector.extract %51[0, 0, 0] : f32 from vector<1x1x1xf32>
      %c0_27 = arith.constant 0 : index
      %c0_28 = arith.constant 0 : index
      %53 = vector.load %arg6[%c0_27, %c0_28] : memref<1x256xf32, #tpu.memory_space<vmem>>, vector<1x256xf32>
      %54 = vector.shape_cast %53 : vector<1x256xf32> to vector<1x1x256xf32>
      %cst_29 = arith.constant dense<0.000000e+00> : vector<1xf32>
      %55 = vector.multi_reduction <add>, %54, %cst_29 [1, 2] : vector<1x1x256xf32> to vector<1xf32>
      %56 = vector.shape_cast %55 : vector<1xf32> to vector<1x1x1xf32>
      %57 = vector.extract %56[0, 0, 0] : f32 from vector<1x1x1xf32>
      %58 = tpu.iota {dimensions = array<i32: 0>} : vector<8x128xi32>
      %c0_i32_30 = arith.constant 0 : i32
      %59 = vector.broadcast %c0_i32_30 : i32 to vector<8x128xi32>
      %60 = arith.cmpi eq, %58, %59 : vector<8x128xi32>
      %c1_i32 = arith.constant 1 : i32
      %61 = vector.broadcast %c1_i32 : i32 to vector<8x128xi32>
      %62 = arith.cmpi eq, %58, %61 : vector<8x128xi32>
      %cst_31 = arith.constant 0.000000e+00 : f32
      %63 = vector.broadcast %57 : f32 to vector<8x128xf32>
      %64 = vector.broadcast %cst_31 : f32 to vector<8x128xf32>
      %65 = arith.select %62, %63, %64 : vector<8x128xi1>, vector<8x128xf32>
      %66 = vector.broadcast %52 : f32 to vector<8x128xf32>
      %67 = arith.select %60, %66, %65 : vector<8x128xi1>, vector<8x128xf32>
      %c0_32 = arith.constant 0 : index
      %c0_33 = arith.constant 0 : index
      %c0_34 = arith.constant 0 : index
      %68 = vector.load %arg4[%c0_32, %c0_33, %c0_34] : memref<1x8x128xf32, #tpu.memory_space<vmem>>, vector<1x8x128xf32>
      %69 = vector.shape_cast %68 : vector<1x8x128xf32> to vector<8x128xf32>
      %70 = vector.shape_cast %67 : vector<8x128xf32> to vector<1x8x128xf32>
      tpu.vector_store %arg4[%c0_32, %c0_33, %c0_34], %70 {strides = array<i32>} : memref<1x8x128xf32, #tpu.memory_space<vmem>>, vector<1x8x128xf32>,
    } else {
    }
    return
  }
  func.func @transform_0(%arg0: i32, %arg1: i32) -> (i32, i32, i32) {
    %c0_i32 = arith.constant 0 : i32
    %c0_i32_0 = arith.constant 0 : i32
    return %arg0, %c0_i32, %arg1 : i32, i32, i32
  }
  func.func @transform_1(%arg0: i32, %arg1: i32) -> (i32, i32, i32) {
    %c0_i32 = arith.constant 0 : i32
    %c0_i32_0 = arith.constant 0 : i32
    return %arg0, %c0_i32, %arg1 : i32, i32, i32
  }
  func.func @transform_2(%arg0: i32, %arg1: i32) -> (i32, i32, i32) {
    %c0_i32 = arith.constant 0 : i32
    %c0_i32_0 = arith.constant 0 : i32
    %c0_i32_1 = arith.constant 0 : i32
    return %arg0, %c0_i32, %c0_i32_0 : i32, i32, i32
  }
}

</mosaic_0001>

<llo_original>
// kernel: tpu_custom_call.1
$region0: #{tpu_custom_call.1}
  #allocation0 [shape = 'u32[]', space=smem, size = 0x4, offset = 0x4, fixed_abs, tag = 'smem constant byte address 0x4 - core index']
  #allocation1 [shape = 'u32[144,128]{1,0:T(1,128)}', space=vmem, size = 0x12000, scoped, tag = 'internal scratch']
  #allocation2 [shape = 'f32[1,256]{1,0:T(1,128)}', space=vmem, size = 0x400, scoped, tag = 'scratch operand']
  #allocation3 [shape = 'f32[1,256]{1,0:T(1,128)}', space=vmem, size = 0x400, scoped, tag = 'scratch operand']
  %s0 = inlined_call_operand.hbm [shape: f32[2,4,256], index: 0, kind: input, shape index: {}]
  %s1 = inlined_call_operand.hbm [shape: f32[2,4,256], index: 1, kind: input, shape index: {}]
  %s2 = inlined_call_operand.hbm [shape: f32[2,8,128], index: 2, kind: output, shape index: {}]
  %s3 = sld [smem:[#allocation0]]
  $region57: #{tpu_custom_call.1} parent=0
    _
  %s5 = ssub.s32 1, %s3
  %s6 = scalar_select 0, %s5, %s3
  $region1: #{tpu_custom_call.1} parent=0
    #allocation4 [shape = 'u8[8192]{0}', space=vmem, size = 0x2000, scoped, tag = 'input window, operand 0']
    #allocation5 [shape = 's32[2]{0}', space=sflag, size = 0x8, scoped, tag = 'scoped memory for tpu_custom_call.1']
    #allocation6 [shape = 's32[2]{0}', space=sflag, size = 0x8, scoped, tag = 'scoped memory for tpu_custom_call.1']
    #allocation7 [shape = 'u8[8192]{0}', space=vmem, size = 0x2000, scoped, tag = 'input window, operand 1']
    #allocation8 [shape = 's32[2]{0}', space=sflag, size = 0x8, scoped, tag = 'scoped memory for tpu_custom_call.1']
    #allocation9 [shape = 'u8[8192]{0}', space=vmem, size = 0x2000, scoped, tag = 'output window, operand 0']
    %7 = vsyncpa [#allocation5], 0
    %s8 = scalar_lea.sflag [#allocation5], 1
    %9 = vsyncpa %s8, 0
    %10 = vsyncpa [#allocation8], 0
    %s11 = scalar_lea.sflag [#allocation8], 1
    %12 = vsyncpa %s11, 0
    %13 = vsyncpa [#allocation6], 0
    %s14 = scalar_lea.sflag [#allocation6], 1
    %15 = vsyncpa %s14, 0
    loop: start=0, step=1, limit=4
    $region2: #{tpu_custom_call.1} parent=1 // loop_pre_header
      _
    $region3: #{tpu_custom_call.1} parent=1 // loop_header
      %s17 = sphi 0, %s21
      %p18 = scmp.ge.s32.totalorder %s17, 4
      %s24 = sphi 0, %s36
      %s25 = sphi 0, %s32
      %s26 = sphi 0, %s24
      %s27 = sphi 0, %s25
      %s28 = sphi 0, %s26
      %s29 = sphi 0, %s27
      %s41 = sphi 0, %s43
      %s44 = sphi 0, %s41
      %s45 = sphi 0, %s44
      %s61 = sphi 0, %s45
      %s69 = sphi 0, %s71
      %s72 = sphi 0, %s69
      %s73 = sphi 0, %s72
      %s89 = sphi 0, %s73
      %s95 = sphi 0, %s97
      %s98 = sphi 0, %s95
      %s99 = sphi 0, %s98
      %s115 = sphi 0, %s99
    $region4: #{tpu_custom_call.1} parent=1 // loop_header_branch
      %20 = sbr.rel (%p18) target = $region8
    $region5: #{tpu_custom_call.1} parent=1 // loop_body
      %s22 = ssub.s32 %s17, 1
      %s23 = ssub.s32 %s17, 2
      %s30 = sadd.s32 1, %s25
      %p31 = scmp.ge.s32.totalorder %s30, 1
      %s32 = scalar_select %p31, 0, %s30
      %s33 = sadd.s32 1, %s24
      %s34 = scalar_select %p31, %s33, %s24
      %p35 = scmp.ge.s32.totalorder %s34, 2
      %s36 = scalar_select %p35, 0, %s34
      %s37 = ssub.s32 %s24, %s36
      %s38 = ssub.s32 %s25, %s32
      %s39 = sor.u32 %s37, %s38
      %p40 = scmp.eq.s32.totalorder %s39, 0
      %s42 = sadd.s32 %s41, 1
      %s43 = scalar_select %p40, %s41, %s42
      %p46 = pneg %p40
      %p47 = scmp.eq.s32.totalorder %s17, 1
      %p48 = por %p46, %p47
      %p49 = scmp.ne.s32.totalorder %s41, %s44
      %p50 = scmp.eq.s32.totalorder %s17, 0
      %p51 = por %p49, %p50
      %p52 = scmp.ne.s32.totalorder %s41, %s44
      %p53 = scmp.eq.s32.totalorder %s22, 1
      %p54 = por %p52, %p53
      %p55 = scmp.ne.s32.totalorder %s44, %s45
      %p56 = scmp.eq.s32.totalorder %s22, 0
      %p57 = por %p55, %p56
      %p58 = scmp.ne.s32.totalorder %s44, %s45
      %p59 = scmp.eq.s32.totalorder %s23, 1
      %p60 = por %p58, %p59
      %p62 = scmp.ne.s32.totalorder %s45, %s61
      %p63 = scmp.eq.s32.totalorder %s23, 0
      %p64 = por %p62, %p63
      %s65 = ssub.s32 %s24, %s36
      %s66 = ssub.s32 %s25, %s32
      %s67 = sor.u32 %s65, %s66
      %p68 = scmp.eq.s32.totalorder %s67, 0
      %s70 = sadd.s32 %s69, 1
      %s71 = scalar_select %p68, %s69, %s70
      %p74 = pneg %p68
      %p75 = scmp.eq.s32.totalorder %s17, 1
      %p76 = por %p74, %p75
      %p77 = scmp.ne.s32.totalorder %s69, %s72
      %p78 = scmp.eq.s32.totalorder %s17, 0
      %p79 = por %p77, %p78
      %p80 = scmp.ne.s32.totalorder %s69, %s72
      %p81 = scmp.eq.s32.totalorder %s22, 1
      %p82 = por %p80, %p81
      %p83 = scmp.ne.s32.totalorder %s72, %s73
      %p84 = scmp.eq.s32.totalorder %s22, 0
      %p85 = por %p83, %p84
      %p86 = scmp.ne.s32.totalorder %s72, %s73
      %p87 = scmp.eq.s32.totalorder %s23, 1
      %p88 = por %p86, %p87
      %p90 = scmp.ne.s32.totalorder %s73, %s89
      %p91 = scmp.eq.s32.totalorder %s23, 0
      %p92 = por %p90, %p91
      %s93 = ssub.s32 %s24, %s36
      %p94 = scmp.eq.s32.totalorder %s93, 0
      %s96 = sadd.s32 %s95, 1
      %s97 = scalar_select %p94, %s95, %s96
      %p100 = pneg %p94
      %p101 = scmp.eq.s32.totalorder %s17, 1
      %p102 = por %p100, %p101
      %p103 = scmp.ne.s32.totalorder %s95, %s98
      %p104 = scmp.eq.s32.totalorder %s17, 0
      %p105 = por %p103, %p104
      %p106 = scmp.ne.s32.totalorder %s95, %s98
      %p107 = scmp.eq.s32.totalorder %s22, 1
      %p108 = por %p106, %p107
      %p109 = scmp.ne.s32.totalorder %s98, %s99
      %p110 = scmp.eq.s32.totalorder %s22, 0
      %p111 = por %p109, %p110
      %p112 = scmp.ne.s32.totalorder %s98, %s99
      %p113 = scmp.eq.s32.totalorder %s23, 1
      %p114 = por %p112, %p113
      %p116 = scmp.ne.s32.totalorder %s99, %s115
      %p117 = scmp.eq.s32.totalorder %s23, 0
      %p118 = por %p116, %p117
      %p119 = scmp.le.s32.totalorder 1, %s17
      %p120 = scmp.lt.s32.totalorder %s17, 3
      %p121 = pnand %p119, %p120
      %p122 = pneg %p121
      // Predicated region
      $region9: #{tpu_custom_call.1} parent=5 // pred_check
        _
      $region10: #{tpu_custom_call.1} parent=5 // pred_check_branch
        %124 = sbr.rel (%p121) target = $region12
      $region11: #{tpu_custom_call.1} parent=5 // pred_region
        %s125 = ssub.s32 %s17, 1
      $region12: #{tpu_custom_call.1} parent=5 // pred_fallthru
        _
      %p126 = scmp.lt.s32.totalorder %s17, 2
      // Predicated region
      $region13: #{tpu_custom_call.1} parent=5 // pred_check
        %p127 = pneg %p126
      $region14: #{tpu_custom_call.1} parent=5 // pred_check_branch
        %129 = sbr.rel (%p127) target = $region16
      $region15: #{tpu_custom_call.1} parent=5 // pred_region
        // Predicated region
        $region17: #{tpu_custom_call.1} parent=15 // pred_check
          %p130 = pneg %p51
        $region18: #{tpu_custom_call.1} parent=15 // pred_check_branch
          %132 = sbr.rel (%p130) target = $region20
        $region19: #{tpu_custom_call.1} parent=15 // pred_region
          %s133 = sand.u32 %s41, 1
          %s134 = scalar_lea.sflag [#allocation5], %s133
          %s135 = sand.u32 %s41, 1
          %s136 = smul.addr %s135, 8
          %s137 = scalar_lea.vmem [#allocation4], %s136
          %s138 = smul.u32 2, %s25
          %s140 = ssub.s32 128, 128
          %141 = vsyncadd %s134, %s140
          %s142 = smul.addr %s24, 2
          %s143 = sadd.s32 %s138, %s142
          %s144 = smul.addr %s143, 64
          %s145 = scalar_lea.hbm %s0, %s144
          %s147 = sshll.u32 %s137, 4
          %s148 = int_to_ptr.vmem [resolvable:$true] %s147
          %150 = dma.hbm_to_vmem [thread:$0]  %s145, 128, %s148, %s134
        $region20: #{tpu_custom_call.1} parent=15 // pred_fallthru
          _
        // Predicated region
        $region21: #{tpu_custom_call.1} parent=15 // pred_check
          %p151 = pneg %p79
        $region22: #{tpu_custom_call.1} parent=15 // pred_check_branch
          %153 = sbr.rel (%p151) target = $region24
        $region23: #{tpu_custom_call.1} parent=15 // pred_region
          %s154 = sand.u32 %s69, 1
          %s155 = scalar_lea.sflag [#allocation8], %s154
          %s156 = sand.u32 %s69, 1
          %s157 = smul.addr %s156, 8
          %s158 = scalar_lea.vmem [#allocation7], %s157
          %s159 = smul.u32 2, %s25
          %s161 = ssub.s32 128, 128
          %162 = vsyncadd %s155, %s161
          %s163 = smul.addr %s24, 2
          %s164 = sadd.s32 %s159, %s163
          %s165 = smul.addr %s164, 64
          %s166 = scalar_lea.hbm %s1, %s165
          %s168 = sshll.u32 %s158, 4
          %s169 = int_to_ptr.vmem [resolvable:$true] %s168
          %171 = dma.hbm_to_vmem [thread:$0]  %s166, 128, %s169, %s155
        $region24: #{tpu_custom_call.1} parent=15 // pred_fallthru
          _
      $region16: #{tpu_custom_call.1} parent=5 // pred_fallthru
        _
      %p172 = scmp.le.s32.totalorder 1, %s17
      %p173 = scmp.lt.s32.totalorder %s17, 3
      %p174 = pnand %p172, %p173
      %p175 = pneg %p174
      // Predicated region
      $region25: #{tpu_custom_call.1} parent=5 // pred_check
        _
      $region26: #{tpu_custom_call.1} parent=5 // pred_check_branch
        %177 = sbr.rel (%p174) target = $region28
      $region27: #{tpu_custom_call.1} parent=5 // pred_region
        %s178 = ssub.s32 %s17, 1
        %s179 = sand.u32 %s44, 1
        %s180 = scalar_lea.sflag [#allocation5], %s179
        %s181 = sand.u32 %s44, 1
        %s182 = smul.addr %s181, 8
        %s183 = scalar_lea.vmem [#allocation4], %s182
        // Predicated region
        $region29: #{tpu_custom_call.1} parent=27 // pred_check
          %p184 = pneg %p57
        $region30: #{tpu_custom_call.1} parent=27 // pred_check_branch
          %186 = sbr.rel (%p184) target = $region32
        $region31: #{tpu_custom_call.1} parent=27 // pred_region
          %187 = dma.done %s180, 128
        $region32: #{tpu_custom_call.1} parent=27 // pred_fallthru
          _
        %s188 = sand.u32 %s72, 1
        %s189 = scalar_lea.sflag [#allocation8], %s188
        %s190 = sand.u32 %s72, 1
        %s191 = smul.addr %s190, 8
        %s192 = scalar_lea.vmem [#allocation7], %s191
        // Predicated region
        $region33: #{tpu_custom_call.1} parent=27 // pred_check
          %p193 = pneg %p85
        $region34: #{tpu_custom_call.1} parent=27 // pred_check_branch
          %195 = sbr.rel (%p193) target = $region36
        $region35: #{tpu_custom_call.1} parent=27 // pred_region
          %196 = dma.done %s189, 128
        $region36: #{tpu_custom_call.1} parent=27 // pred_fallthru
          _
        %s197 = sand.u32 %s44, 1
        %s198 = scalar_lea.sflag [#allocation5], %s197
        %s199 = sand.u32 %s44, 1
        %s200 = smul.addr %s199, 8
        %s201 = scalar_lea.vmem [#allocation4], %s200
        %p202 = pneg %p57
        %p203 = pneg %p54
        %s204 = sand.u32 %s72, 1
        %s205 = scalar_lea.sflag [#allocation8], %s204
        %s206 = sand.u32 %s72, 1
        %s207 = smul.addr %s206, 8
        %s208 = scalar_lea.vmem [#allocation7], %s207
        %p209 = pneg %p85
        %p210 = pneg %p82
        %p211 = pneg %p111
        %p212 = pneg %p108
        %s213 = sand.u32 %s98, 1
        %s214 = scalar_lea.sflag [#allocation6], %s213
        %s215 = sand.u32 %s98, 1
        %s216 = smul.addr %s215, 8
        %s217 = scalar_lea.vmem [#allocation9], %s216
        %s218 = smul.u32 2, %s27
        %s219 = smul.u32 2, %s27
        %p220 = scmp.eq.s32.totalorder %s27, 0
        // Predicated region
        $region37: #{tpu_custom_call.1} parent=27 // pred_check
          %p221 = pneg %p220
        $region38: #{tpu_custom_call.1} parent=27 // pred_check_branch
          %223 = sbr.rel (%p221) target = $region40
        $region39: #{tpu_custom_call.1} parent=27 // pred_region
          %v224 = vlaneseq
          %vm225 = vcmp.ge.s32.totalorder %v224, 0
          %vm226 = vcmp.lt.s32.totalorder %v224, 256
          %vm227 = vmand %vm225, %vm226
          %228 = vst.msk [vmem:[#allocation2] sm:$0x3] %vm227, 0.0
          %229 = vst.msk [vmem:[#allocation3] sm:$0x3] %vm227, 0.0
        $region40: #{tpu_custom_call.1} parent=27 // pred_fallthru
          _
        %v230 = vld [vmem:[%s183] sm:$0xff]
        %v231 = vld [vmem:[%s192] sm:$0xff]
        %v232 = vmul.f32 %v230, 0.2
        %v233 = vmul.f32 %v231, 0.2
        %v235 = vcombine.high %v232, %v232
        %vm237 = vcmask 1043456
        %v238 = vsel %vm237, %v232, -inf
        %v239 = vrot.slane %v238, 4
        %v240 = vmax.f32 %v238, %v239
        %v241 = vrot.slane %v240, 2
        %v242 = vmax.f32 %v240, %v241
        %v243 = vrot.slane %v242, 1
        %v244 = vmax.f32 %v242, %v243
        %v245 = vsel %vm237, %v235, -inf
        %v246 = vrot.slane %v245, 4
        %v247 = vmax.f32 %v245, %v246
        %v248 = vrot.slane %v247, 2
        %v249 = vmax.f32 %v247, %v248
        %v250 = vrot.slane %v249, 1
        %v251 = vmax.f32 %v249, %v250
        %v254 = vcombine.low %v244, %v251
        %v256 = vsub.f32 %v232, %v254
        %v258 = vcombine.high %v233, %v233
        %v260 = vsel %vm237, %v233, -inf
        %v261 = vrot.slane %v260, 4
        %v262 = vmax.f32 %v260, %v261
        %v263 = vrot.slane %v262, 2
        %v264 = vmax.f32 %v262, %v263
        %v265 = vrot.slane %v264, 1
        %v266 = vmax.f32 %v264, %v265
        %v267 = vsel %vm237, %v258, -inf
        %v268 = vrot.slane %v267, 4
        %v269 = vmax.f32 %v267, %v268
        %v270 = vrot.slane %v269, 2
        %v271 = vmax.f32 %v269, %v270
        %v272 = vrot.slane %v271, 1
        %v273 = vmax.f32 %v271, %v272
        %v276 = vcombine.low %v266, %v273
        %v278 = vsub.f32 %v233, %v276
        %v279 = vmul.f32 %v256, 1.442695
        %v280 = vpow.pop %v279
        %v282 = vcombine.high %v280, %v280
        %v284 = vsel %vm237, %v280, 0.0
        %v285 = vrot.slane %v284, 4
        %v286 = vadd.f32 %v284, %v285
        %v287 = vrot.slane %v286, 2
        %v288 = vadd.f32 %v286, %v287
        %v289 = vrot.slane %v288, 1
        %v290 = vadd.f32 %v288, %v289
        %v291 = vsel %vm237, %v282, 0.0
        %v292 = vrot.slane %v291, 4
        %v293 = vadd.f32 %v291, %v292
        %v294 = vrot.slane %v293, 2
        %v295 = vadd.f32 %v293, %v294
        %v296 = vrot.slane %v295, 1
        %v297 = vadd.f32 %v295, %v296
        %v298 = vmul.f32 %v278, 1.442695
        %v299 = vpow.pop %v298
        %v301 = vcombine.high %v299, %v299
        %v303 = vsel %vm237, %v299, 0.0
        %v304 = vrot.slane %v303, 4
        %v305 = vadd.f32 %v303, %v304
        %v306 = vrot.slane %v305, 2
        %v307 = vadd.f32 %v305, %v306
        %v308 = vrot.slane %v307, 1
        %v309 = vadd.f32 %v307, %v308
        %v310 = vsel %vm237, %v301, 0.0
        %v311 = vrot.slane %v310, 4
        %v312 = vadd.f32 %v310, %v311
        %v313 = vrot.slane %v312, 2
        %v314 = vadd.f32 %v312, %v313
        %v315 = vrot.slane %v314, 1
        %v316 = vadd.f32 %v314, %v315
        %v317 = vsub.f32 %v278, %v256
        %v318 = vmul.f32 %v299, %v317
        %v320 = vcombine.high %v318, %v318
        %v322 = vsel %vm237, %v318, 0.0
        %v323 = vrot.slane %v322, 4
        %v324 = vadd.f32 %v322, %v323
        %v325 = vrot.slane %v324, 2
        %v326 = vadd.f32 %v324, %v325
        %v327 = vrot.slane %v326, 1
        %v328 = vadd.f32 %v326, %v327
        %v329 = vsel %vm237, %v320, 0.0
        %v330 = vrot.slane %v329, 4
        %v331 = vadd.f32 %v329, %v330
        %v332 = vrot.slane %v331, 2
        %v333 = vadd.f32 %v331, %v332
        %v334 = vrot.slane %v333, 1
        %v335 = vadd.f32 %v333, %v334
        %v336 = vrcp.pop %v309
        %v337 = vmul.f32 1.0, %v336
        %v338 = vrcp.pop %v316
        %v339 = vmul.f32 1.0, %v338
        %v340 = vmul.f32 %v328, %v337
        %v341 = vmul.f32 %v335, %v339
        %v342 = vmul.f32 %v290, %v337
        %v343 = vmul.f32 %v297, %v339
        %v344 = vlog2.pop %v342
        %v345 = vmul.f32 %v344, 0.6931472
        %v346 = vlog2.pop %v343
        %v347 = vmul.f32 %v346, 0.6931472
        %v348 = vadd.f32 %v340, %v345
        %v349 = vadd.f32 %v341, %v347
        %v350 = vld [vmem:[#allocation2] sm:$0x3]
        %v353 = vcombine.low %v348, %v349
        %v355 = vunpack.c.l.s4 1966171168
        %v356 = vunpack.c.0.s8 %v355
        %v357 = vlaneseq
        %v358 = vshrl.u32 %v357, 7
        %v359 = vsub.s32 %v356, %v358
        %v360 = vrot.slane %v353, %v359
        %v362 = vunpack.c.l.s4 1966171168
        %v363 = vunpack.c.0.s8 %v362
        %v364 = vlaneseq
        %v365 = vshrl.u32 %v364, 7
        %v366 = vsub.s32 %v363, %v365
        %v367 = vrot.slane %v360, %v366
        %v369 = vadd.f32 %v350, %v367
        %v370 = vlaneseq
        %vm371 = vcmp.ge.s32.totalorder %v370, 0
        %vm372 = vcmp.lt.s32.totalorder %v370, 256
        %vm373 = vmand %vm371, %vm372
        %374 = vst.msk [vmem:[#allocation2] sm:$0x3] %vm373, %v369
        %v375 = vsub.f32 %v230, %v231
        %v376 = vmul.f32 %v375, %v375
        %v378 = vcombine.high %v376, %v376
        %v380 = vsel %vm237, %v376, 0.0
        %v381 = vrot.slane %v380, 4
        %v382 = vadd.f32 %v380, %v381
        %v383 = vrot.slane %v382, 2
        %v384 = vadd.f32 %v382, %v383
        %v385 = vrot.slane %v384, 1
        %v386 = vadd.f32 %v384, %v385
        %v387 = vsel %vm237, %v378, 0.0
        %v388 = vrot.slane %v387, 4
        %v389 = vadd.f32 %v387, %v388
        %v390 = vrot.slane %v389, 2
        %v391 = vadd.f32 %v389, %v390
        %v392 = vrot.slane %v391, 1
        %v393 = vadd.f32 %v391, %v392
        %v394 = vld [vmem:[#allocation3] sm:$0x3]
        %v397 = vcombine.low %v386, %v393
        %v399 = vunpack.c.l.s4 1966171168
        %v400 = vunpack.c.0.s8 %v399
        %v401 = vlaneseq
        %v402 = vshrl.u32 %v401, 7
        %v403 = vsub.s32 %v400, %v402
        %v404 = vrot.slane %v397, %v403
        %v406 = vunpack.c.l.s4 1966171168
        %v407 = vunpack.c.0.s8 %v406
        %v408 = vlaneseq
        %v409 = vshrl.u32 %v408, 7
        %v410 = vsub.s32 %v407, %v409
        %v411 = vrot.slane %v404, %v410
        %v413 = vadd.f32 %v394, %v411
        %414 = vst.msk [vmem:[#allocation3] sm:$0x3] %vm373, %v413
        // Predicated region
        $region41: #{tpu_custom_call.1} parent=27 // pred_check
          %p415 = pneg %p220
        $region42: #{tpu_custom_call.1} parent=27 // pred_check_branch
          %417 = sbr.rel (%p415) target = $region44
        $region43: #{tpu_custom_call.1} parent=27 // pred_region
          %v418 = vld [vmem:[#allocation2] sm:$0x3]
          %v420 = vlaneseq
          %v421 = vshrl.u32 %v420, 7
          %v422 = vsub.s32 0, %v421
          %v423 = vrot.slane %v418, %v422
          %v424 = vlaneseq
          %v425 = vshrl.u32 %v424, 7
          %v426 = vsub.s32 1, %v425
          %v427 = vrot.slane %v418, %v426
          %vm430 = vcmask 1040384
          %v431 = vsel %vm430, %v423, 0.0
          %v432 = vsel %vm430, %v427, 0.0
          %v433 = vadd.f32 %v431, %v432
          %434 = vadd.xlane.f32.xlu0 %v433
          %v435 = vpop.xlane.xlu0 %434
          %v436 = vrot.slane %v435, 4
          %v437 = vadd.f32 %v435, %v436
          %v438 = vrot.slane %v437, 2
          %v439 = vadd.f32 %v437, %v438
          %v440 = vrot.slane %v439, 1
          %v441 = vadd.f32 %v439, %v440
          %s442 = vtos %v441
          %v443 = vld [vmem:[#allocation3] sm:$0x3]
          %v445 = vlaneseq
          %v446 = vshrl.u32 %v445, 7
          %v447 = vsub.s32 0, %v446
          %v448 = vrot.slane %v443, %v447
          %v449 = vlaneseq
          %v450 = vshrl.u32 %v449, 7
          %v451 = vsub.s32 1, %v450
          %v452 = vrot.slane %v443, %v451
          %v455 = vsel %vm430, %v448, 0.0
          %v456 = vsel %vm430, %v452, 0.0
          %v457 = vadd.f32 %v455, %v456
          %458 = vadd.xlane.f32.xlu0 %v457
          %v459 = vpop.xlane.xlu0 %458
          %v460 = vrot.slane %v459, 4
          %v461 = vadd.f32 %v459, %v460
          %v462 = vrot.slane %v461, 2
          %v463 = vadd.f32 %v461, %v462
          %v464 = vrot.slane %v463, 1
          %v465 = vadd.f32 %v463, %v464
          %s466 = vtos %v465
          %v467 = vlaneseq
          %v468 = vshrl.u32 %v467, 7
          %vm469 = vcmp.eq.s32.totalorder %v468, 0
          %vm470 = vcmp.eq.s32.totalorder %v468, 1
          %v471 = vstv %s466
          %v472 = vsel %vm470, %v471, 0.0
          %v473 = vstv %s442
          %v474 = vsel %vm469, %v473, %v472
          %475 = vst [vmem:[%s217] sm:$0xff] %v474
        $region44: #{tpu_custom_call.1} parent=27 // pred_fallthru
          _
        %s476 = sand.u32 %s98, 1
        %s477 = scalar_lea.sflag [#allocation6], %s476
        %s478 = sand.u32 %s98, 1
        %s479 = smul.addr %s478, 8
        %s480 = scalar_lea.vmem [#allocation9], %s479
        // Predicated region
        $region45: #{tpu_custom_call.1} parent=27 // pred_check
          %p481 = pneg %p108
        $region46: #{tpu_custom_call.1} parent=27 // pred_check_branch
          %483 = sbr.rel (%p481) target = $region48
        $region47: #{tpu_custom_call.1} parent=27 // pred_region
          %s485 = ssub.s32 128, 128
          %486 = vsyncadd %s477, %s485
          %s487 = smul.addr %s26, 128
          %s488 = scalar_lea.hbm %s2, %s487
          %s490 = sshll.u32 %s480, 4
          %s491 = int_to_ptr.vmem [resolvable:$true] %s490
          %493 = dma.vmem_to_hbm [thread:$0]  %s491, 128, %s488, %s477
        $region48: #{tpu_custom_call.1} parent=27 // pred_fallthru
          _
      $region28: #{tpu_custom_call.1} parent=5 // pred_fallthru
        _
      %p494 = scmp.le.s32.totalorder 2, %s17
      // Predicated region
      $region49: #{tpu_custom_call.1} parent=5 // pred_check
        %p495 = pneg %p494
      $region50: #{tpu_custom_call.1} parent=5 // pred_check_branch
        %497 = sbr.rel (%p495) target = $region52
      $region51: #{tpu_custom_call.1} parent=5 // pred_region
        %s498 = ssub.s32 %s17, 2
        // Predicated region
        $region53: #{tpu_custom_call.1} parent=51 // pred_check
          %p499 = pneg %p114
        $region54: #{tpu_custom_call.1} parent=51 // pred_check_branch
          %501 = sbr.rel (%p499) target = $region56
        $region55: #{tpu_custom_call.1} parent=51 // pred_region
          %s502 = sand.u32 %s99, 1
          %s503 = scalar_lea.sflag [#allocation6], %s502
          %s504 = sand.u32 %s99, 1
          %s505 = smul.addr %s504, 8
          %s506 = scalar_lea.vmem [#allocation9], %s505
          %507 = dma.done %s503, 128
        $region56: #{tpu_custom_call.1} parent=51 // pred_fallthru
          _
      $region52: #{tpu_custom_call.1} parent=5 // pred_fallthru
        _
    $region6: #{tpu_custom_call.1} parent=1 // loop_footer
      %s21 = sadd.s32 1, %s17
    $region7: #{tpu_custom_call.1} parent=1 // loop_footer_branch
      %16 = sbr.rel target = $region3
    $region8: #{tpu_custom_call.1} parent=1 // loop_exit
      _
    %508 = vsyncpa [#allocation5], 1
    %s509 = scalar_lea.sflag [#allocation5], 1
    %510 = vsyncpa %s509, 1
    %511 = vsyncpa [#allocation8], 1
    %s512 = scalar_lea.sflag [#allocation8], 1
    %513 = vsyncpa %s512, 1
    %514 = vsyncpa [#allocation6], 1
    %s515 = scalar_lea.sflag [#allocation6], 1
    %516 = vsyncpa %s515, 1

</llo_original>
